<compile_context>
chip_gen: v7x
topology: tpu7x:2x2x1
jax: 0.10.0
libtpu: 0.0.40
codegen_flags: <defaults>
</compile_context>

<pallas_src>
import functools

import jax
import jax.numpy as jnp
from jax.experimental import pallas as pl
from jax.experimental.pallas import tpu as pltpu


_NEG_BIG = -9000000000000000.0  # matches the PyTorch module's zero_vec


def _gat_kernel(f1_ref, f2_ref, wha_ref, adj_ref, out_ref, m_sc, acc_sc, *,
                alpha, concat, fout):
    """One (batch, query-tile, key-tile) grid step.

    f1_ref  : (1, TQ, 1)       f32   query-side score  (Wh a1)_i
    f2_ref  : (1, 1,  TK)      f32   key-side score    (Wh a2)_j
    wha_ref : (1, TK, Fout+1)  bf16  projected features with a ones column
    adj_ref : (1, TQ, TK)      f32   adjacency tile (>0 means edge)
    out_ref : (1, TQ, Fout)          resident across the key axis
    m_sc    : (TQ, 1)          f32   running row max
    acc_sc  : (TQ, Fout+1)     f32   running [sum_j p_ij Wh_j | sum_j p_ij]
    """
    k = pl.program_id(2)

    @pl.when(k == 0)
    def _():
        m_sc[...] = jnp.full_like(m_sc, -jnp.inf)
        acc_sc[...] = jnp.zeros_like(acc_sc)

    f1 = f1_ref[0]                                   # (TQ, 1)
    f2 = f2_ref[0]                                   # (1, TK)
    wha = wha_ref[0]                                 # (TK, Fout+1) bf16
    mask = adj_ref[0] > 0                            # (TQ, TK)

    # e_ij = LeakyReLU(f1_i + f2_j), then adjacency masking.
    e = f1 + f2                                      # (TQ, TK)
    e = jnp.where(e > 0, e, alpha * e)               # LeakyReLU(alpha)
    e = jnp.where(mask, e, jnp.float32(_NEG_BIG))

    # Online softmax: running max + rescaled accumulator (flash pattern).
    m_prev = m_sc[...]
    m_new = jnp.maximum(m_prev, jnp.max(e, axis=-1, keepdims=True))  # (TQ, 1)
    corr = jnp.exp(m_prev - m_new)                   # exp(-inf)=0 on first tile
    p = jnp.exp(e - m_new)                           # unnormalized probs, <= 1

    # (Inference-mode dropout on the attention matrix = identity.)

    # Aggregation AND row-sum in a single MXU matmul (ones column in wha):
    #   pa[:, :Fout] = p @ Wh_tile,   pa[:, Fout] = rowsum(p).
    pa = jnp.dot(p.astype(jnp.bfloat16), wha,
                 preferred_element_type=jnp.float32)                 # (TQ, Fout+1)
    acc_sc[...] = corr * acc_sc[...] + pa
    m_sc[...] = m_new

    @pl.when(k == pl.num_programs(2) - 1)
    def _():
        acc = acc_sc[...]
        s = acc[:, fout:fout + 1]                    # softmax denominator column
        h = acc[:, :fout] * pl.reciprocal(s, approx=True)
        if concat:
            # ELU.  exp-1 kept instead of expm1 for Mosaic-lowering safety;
            # the absolute error near 0 is ~1e-7, far below the bf16 /
            # approx-reciprocal noise floor of this kernel.
            h = jnp.where(h > 0, h, jnp.exp(jnp.minimum(h, 0.0)) - 1.0)
        out_ref[0] = h.astype(out_ref.dtype)


def _pick_tile(n, cap):
    """Largest tile <= cap that divides n (sublane/lane friendly sizes);
    falls back to the full extent (block == full dim is always legal)."""
    if n <= cap:
        return n
    for cand in (1024, 512, 256, 128, 64, 32, 16, 8):
        if cand <= cap and n % cand == 0:
            return cand
    return n


def gat_forward(x, adj, W, a, *, alpha=0.2, concat=True):
    """x: (B, N, Fin); adj: (B, N, N); W: (Fout, Fin) (torch Linear weight);
    a: (2*Fout, 1). Returns (B, N, Fout) -- eval-mode forward."""
    B, N, Fin = x.shape
    Fout = W.shape[0]

    Wt = jnp.asarray(W, jnp.float32).T                        # (Fin, Fout)
    a_arr = jnp.asarray(a, jnp.float32)
    a1 = a_arr[:Fout, :]                                      # (Fout, 1)
    a2 = a_arr[Fout:, :]                                      # (Fout, 1)

    # Fused projection: x @ [W^T | W^T a1 | W^T a2] -> Wh, f1, f2 in one GEMM.
    wcat = jnp.concatenate([Wt, Wt @ a1, Wt @ a2], axis=1)    # (Fin, Fout + 2)
    proj = jnp.einsum("bnf,fo->bno", x.astype(jnp.float32), wcat,
                      preferred_element_type=jnp.float32)     # (B, N, Fout + 2)

    f1 = proj[..., Fout:Fout + 1]                             # (B, N, 1)
    f2t = jnp.swapaxes(proj[..., Fout + 1:Fout + 2], 1, 2)    # (B, 1, N)

    # Projected features + trailing ones column (bf16 for the MXU): the
    # aggregation matmul then emits the softmax denominator as its last lane.
    wha = jnp.concatenate(
        [proj[..., :Fout], jnp.ones((B, N, 1), jnp.float32)],
        axis=-1).astype(jnp.bfloat16)                         # (B, N, Fout + 1)

    # Adjacency streamed as-is; >0 compare done in-kernel (no extra wrapper
    # pass over the N^2 array).
    adj_in = jnp.asarray(adj)

    TQ = _pick_tile(N, 256)    # query-row tile
    TK = _pick_tile(N, 512)    # key tile (flash-style reduction axis)
    grid = (B, N // TQ, N // TK)

    kernel = functools.partial(_gat_kernel, alpha=float(alpha),
                               concat=bool(concat), fout=Fout)

    return pl.pallas_call(
        kernel,
        out_shape=jax.ShapeDtypeStruct((B, N, Fout), x.dtype),
        grid_spec=pltpu.PrefetchScalarGridSpec(
            num_scalar_prefetch=0,
            grid=grid,
            in_specs=[
                pl.BlockSpec((1, TQ, 1), lambda b, q, k: (b, q, 0)),          # f1
                pl.BlockSpec((1, 1, TK), lambda b, q, k: (b, 0, k)),          # f2
                pl.BlockSpec((1, TK, Fout + 1), lambda b, q, k: (b, k, 0)),   # wha
                pl.BlockSpec((1, TQ, TK), lambda b, q, k: (b, q, k)),         # adj
            ],
            out_specs=pl.BlockSpec((1, TQ, Fout), lambda b, q, k: (b, q, 0)),
            scratch_shapes=[
                pltpu.VMEM((TQ, 1), jnp.float32),           # running row max
                pltpu.VMEM((TQ, Fout + 1), jnp.float32),    # [acc | rowsum]
            ],
        ),
        compiler_params=pltpu.CompilerParams(
            dimension_semantics=("parallel", "parallel", "arbitrary"),
            vmem_limit_bytes=32 * 1024 * 1024,
        ),
    )(f1, f2t, wha, adj_in)


def _xavier_uniform(key, shape, gain=1.0):
    fan_in, fan_out = shape[1], shape[0]
    limit = gain * jnp.sqrt(6.0 / (fan_in + fan_out))
    return jax.random.uniform(key, shape, jnp.float32, -limit, limit)


def _reference_jax(x, adj, W, a, alpha, concat):
    # Pure-JAX f32 reference of the PyTorch forward (eval mode).
    Fout = W.shape[0]
    Wh = jnp.einsum("bnf,of->bno", x, W)
    f1 = jnp.einsum("bno,o->bn", Wh, a[:Fout, 0])
    f2 = jnp.einsum("bno,o->bn", Wh, a[Fout:, 0])
    e = f1[:, :, None] + f2[:, None, :]
    e = jnp.where(e > 0, e, alpha * e)
    e = jnp.where(adj > 0, e, _NEG_BIG)
    att = jax.nn.softmax(e, axis=-1)
    h = jnp.einsum("bnm,bmo->bno", att, Wh)
    return jnp.where(h > 0, h, jnp.exp(h) - 1.0) if concat else h


if __name__ == "__main__":
    B, N, F_IN, F_OUT = 2, 8, 16, 32
    ALPHA = 0.2
    CONCAT = True

    key = jax.random.PRNGKey(0)
    k_x, k_adj, k_w, k_a = jax.random.split(key, 4)

    x = jax.random.normal(k_x, (B, N, F_IN), dtype=jnp.float32)

    # Random sparse-ish adjacency with self-loops.
    adj = (jax.random.uniform(k_adj, (B, N, N)) > 0.5).astype(jnp.float32)
    adj = jnp.maximum(adj, jnp.eye(N, dtype=jnp.float32)[None])

    # Deterministic parameter init matching nn.init.xavier_uniform_.
    W = _xavier_uniform(k_w, (F_OUT, F_IN), gain=1.0)        # Linear weight (out, in)
    a = _xavier_uniform(k_a, (2 * F_OUT, 1), gain=1.414)     # attention vector

    out = gat_forward(x, adj, W, a, alpha=ALPHA, concat=CONCAT)
    out = jax.block_until_ready(out)

    ref = _reference_jax(x, adj, W, a, ALPHA, CONCAT)
    assert out.shape == (B, N, F_OUT)
    # bf16 MXU aggregation + approx reciprocal is an intentional
    # precision/throughput trade -> looser tolerance than f32-everywhere.
    assert jnp.allclose(out, ref, atol=5e-2, rtol=5e-2), "mismatch vs reference"

    print("KERNEL_OK")
</pallas_src>

<mosaic_0001>
module attributes {stable_mosaic.version = 11 : i64} {
  func.func @_gat_kernel(%arg0: i32, %arg1: i32, %arg2: i32, %arg3: memref<1x8x1xf32, #tpu.memory_space<vmem>>, %arg4: memref<1x1x8xf32, #tpu.memory_space<vmem>>, %arg5: memref<1x8x33xbf16, #tpu.memory_space<vmem>>, %arg6: memref<1x8x8xf32, #tpu.memory_space<vmem>>, %arg7: memref<1x8x32xf32, #tpu.memory_space<vmem>>, %arg8: memref<8x1xf32, #tpu.memory_space<vmem>>, %arg9: memref<8x33xf32, #tpu.memory_space<vmem>>) attributes {dimension_semantics = [#tpu.dimension_semantics<parallel>, #tpu.dimension_semantics<parallel>, #tpu.dimension_semantics<arbitrary>], iteration_bounds = array<i64: 2, 1, 1>, scalar_prefetch = 0 : i64, scratch_operands = 2 : i64, tpu.core_type = #tpu.core_type<tc>, window_params = [{transform_indices = @transform_0, window_bounds = array<i64: 1, 8, 1>}, {transform_indices = @transform_1, window_bounds = array<i64: 1, 1, 8>}, {transform_indices = @transform_2, window_bounds = array<i64: 1, 8, 33>}, {transform_indices = @transform_3, window_bounds = array<i64: 1, 8, 8>}, {transform_indices = @transform_4, window_bounds = array<i64: 1, 8, 32>}]} {
    %c0_i32 = arith.constant 0 : i32
    %0 = arith.cmpi eq, %arg2, %c0_i32 : i32
    %1 = arith.extui %0 : i1 to i32
    %c0_i32_0 = arith.constant 0 : i32
    %2 = arith.cmpi ne, %1, %c0_i32_0 : i32
    scf.if %2 {
      %cst_27 = arith.constant 0xFF800000 : f32
      %43 = vector.broadcast %cst_27 : f32 to vector<8x1xf32>
      %c0_28 = arith.constant 0 : index
      %c0_29 = arith.constant 0 : index
      %44 = vector.load %arg8[%c0_28, %c0_29] : memref<8x1xf32, #tpu.memory_space<vmem>>, vector<8x1xf32>
      tpu.vector_store %arg8[%c0_28, %c0_29], %43 {strides = array<i32>} : memref<8x1xf32, #tpu.memory_space<vmem>>, vector<8x1xf32>,
      %cst_30 = arith.constant 0.000000e+00 : f32
      %45 = vector.broadcast %cst_30 : f32 to vector<8x33xf32>
      %c0_31 = arith.constant 0 : index
      %c0_32 = arith.constant 0 : index
      %46 = vector.load %arg9[%c0_31, %c0_32] : memref<8x33xf32, #tpu.memory_space<vmem>>, vector<8x33xf32>
      tpu.vector_store %arg9[%c0_31, %c0_32], %45 {strides = array<i32>} : memref<8x33xf32, #tpu.memory_space<vmem>>, vector<8x33xf32>,
    } else {
    }
    %c0 = arith.constant 0 : index
    %c0_1 = arith.constant 0 : index
    %c0_2 = arith.constant 0 : index
    %3 = vector.load %arg3[%c0, %c0_1, %c0_2] : memref<1x8x1xf32, #tpu.memory_space<vmem>>, vector<1x8x1xf32>
    %4 = vector.shape_cast %3 : vector<1x8x1xf32> to vector<8x1xf32>
    %c0_3 = arith.constant 0 : index
    %c0_4 = arith.constant 0 : index
    %c0_5 = arith.constant 0 : index
    %5 = vector.load %arg4[%c0_3, %c0_4, %c0_5] : memref<1x1x8xf32, #tpu.memory_space<vmem>>, vector<1x1x8xf32>
    %6 = vector.shape_cast %5 : vector<1x1x8xf32> to vector<1x8xf32>
    %c0_6 = arith.constant 0 : index
    %c0_7 = arith.constant 0 : index
    %c0_8 = arith.constant 0 : index
    %7 = vector.load %arg5[%c0_6, %c0_7, %c0_8] : memref<1x8x33xbf16, #tpu.memory_space<vmem>>, vector<1x8x33xbf16>
    %8 = vector.shape_cast %7 : vector<1x8x33xbf16> to vector<8x33xbf16>
    %c0_9 = arith.constant 0 : index
    %c0_10 = arith.constant 0 : index
    %c0_11 = arith.constant 0 : index
    %9 = vector.load %arg6[%c0_9, %c0_10, %c0_11] : memref<1x8x8xf32, #tpu.memory_space<vmem>>, vector<1x8x8xf32>
    %10 = vector.shape_cast %9 : vector<1x8x8xf32> to vector<8x8xf32>
    %cst = arith.constant 0.000000e+00 : f32
    %11 = vector.broadcast %cst : f32 to vector<8x8xf32>
    %12 = arith.cmpf ogt, %10, %11 : vector<8x8xf32>
    %13 = vector.broadcast %4 : vector<8x1xf32> to vector<8x8xf32>
    %14 = vector.broadcast %6 : vector<1x8xf32> to vector<8x8xf32>
    %15 = arith.addf %13, %14 : vector<8x8xf32>
    %cst_12 = arith.constant 0.000000e+00 : f32
    %16 = vector.broadcast %cst_12 : f32 to vector<8x8xf32>
    %17 = arith.cmpf ogt, %15, %16 : vector<8x8xf32>
    %cst_13 = arith.constant 2.000000e-01 : f32
    %18 = vector.broadcast %cst_13 : f32 to vector<8x8xf32>
    %19 = arith.mulf %18, %15 : vector<8x8xf32>
    %20 = arith.select %17, %15, %19 : vector<8x8xi1>, vector<8x8xf32>
    %cst_14 = arith.constant -9.000000e+15 : f32
    %21 = vector.broadcast %cst_14 : f32 to vector<8x8xf32>
    %22 = arith.select %12, %20, %21 : vector<8x8xi1>, vector<8x8xf32>
    %c0_15 = arith.constant 0 : index
    %c0_16 = arith.constant 0 : index
    %23 = vector.load %arg8[%c0_15, %c0_16] : memref<8x1xf32, #tpu.memory_space<vmem>>, vector<8x1xf32>
    %cst_17 = arith.constant dense<0xFF800000> : vector<8xf32>
    %24 = vector.multi_reduction <maximumf>, %22, %cst_17 [1] : vector<8x8xf32> to vector<8xf32>
    %25 = vector.shape_cast %24 : vector<8xf32> to vector<8x1xf32>
    %26 = arith.maximumf %23, %25 : vector<8x1xf32>
    %27 = arith.subf %23, %26 : vector<8x1xf32>
    %28 = math.exp %27 : vector<8x1xf32>
    %29 = vector.broadcast %26 : vector<8x1xf32> to vector<8x8xf32>
    %30 = arith.subf %22, %29 : vector<8x8xf32>
    %31 = math.exp %30 : vector<8x8xf32>
    %32 = arith.truncf %31 : vector<8x8xf32> to vector<8x8xbf16>
    %cst_18 = arith.constant dense<0.000000e+00> : vector<8x33xf32>
    %33 = tpu.matmul %32, %8, %cst_18 {dimension_numbers = #tpu.dot_dimension_numbers<[1], [0], [0], [1], [0, 0, 1, 1], [], []>} : vector<8x8xbf16>, vector<8x33xbf16>, vector<8x33xf32> -> vector<8x33xf32>
    %c0_19 = arith.constant 0 : index
    %c0_20 = arith.constant 0 : index
    %34 = vector.load %arg9[%c0_19, %c0_20] : memref<8x33xf32, #tpu.memory_space<vmem>>, vector<8x33xf32>
    %35 = vector.broadcast %28 : vector<8x1xf32> to vector<8x33xf32>
    %36 = arith.mulf %35, %34 : vector<8x33xf32>
    %37 = arith.addf %36, %33 : vector<8x33xf32>
    %c0_21 = arith.constant 0 : index
    %c0_22 = arith.constant 0 : index
    %38 = vector.load %arg9[%c0_21, %c0_22] : memref<8x33xf32, #tpu.memory_space<vmem>>, vector<8x33xf32>
    tpu.vector_store %arg9[%c0_21, %c0_22], %37 {strides = array<i32>} : memref<8x33xf32, #tpu.memory_space<vmem>>, vector<8x33xf32>,
    %c0_23 = arith.constant 0 : index
    %c0_24 = arith.constant 0 : index
    %39 = vector.load %arg8[%c0_23, %c0_24] : memref<8x1xf32, #tpu.memory_space<vmem>>, vector<8x1xf32>
    tpu.vector_store %arg8[%c0_23, %c0_24], %26 {strides = array<i32>} : memref<8x1xf32, #tpu.memory_space<vmem>>, vector<8x1xf32>,
    %c0_i32_25 = arith.constant 0 : i32
    %40 = arith.cmpi eq, %arg2, %c0_i32_25 : i32
    %41 = arith.extui %40 : i1 to i32
    %c0_i32_26 = arith.constant 0 : i32
    %42 = arith.cmpi ne, %41, %c0_i32_26 : i32
    scf.if %42 {
      %c0_27 = arith.constant 0 : index
      %c0_28 = arith.constant 0 : index
      %43 = vector.load %arg9[%c0_27, %c0_28] : memref<8x33xf32, #tpu.memory_space<vmem>>, vector<8x33xf32>
      %44 = vector.extract_strided_slice %43 {offsets = [0, 32], sizes = [8, 1], strides = [1, 1]} : vector<8x33xf32> to vector<8x1xf32>
      %45 = vector.extract_strided_slice %43 {offsets = [0, 0], sizes = [8, 32], strides = [1, 1]} : vector<8x33xf32> to vector<8x32xf32>
      %46 = tpu.reciprocal %44 {approx = true} : vector<8x1xf32> -> vector<8x1xf32>
      %47 = vector.broadcast %46 : vector<8x1xf32> to vector<8x32xf32>
      %48 = arith.mulf %45, %47 : vector<8x32xf32>
      %cst_29 = arith.constant 0.000000e+00 : f32
      %49 = vector.broadcast %cst_29 : f32 to vector<8x32xf32>
      %50 = arith.cmpf ogt, %48, %49 : vector<8x32xf32>
      %cst_30 = arith.constant 0.000000e+00 : f32
      %51 = vector.broadcast %cst_30 : f32 to vector<8x32xf32>
      %52 = arith.minimumf %48, %51 : vector<8x32xf32>
      %53 = math.exp %52 : vector<8x32xf32>
      %cst_31 = arith.constant 1.000000e+00 : f32
      %54 = vector.broadcast %cst_31 : f32 to vector<8x32xf32>
      %55 = arith.subf %53, %54 : vector<8x32xf32>
      %56 = arith.select %50, %48, %55 : vector<8x32xi1>, vector<8x32xf32>
      %c0_32 = arith.constant 0 : index
      %c0_33 = arith.constant 0 : index
      %c0_34 = arith.constant 0 : index
      %57 = vector.load %arg7[%c0_32, %c0_33, %c0_34] : memref<1x8x32xf32, #tpu.memory_space<vmem>>, vector<1x8x32xf32>
      %58 = vector.shape_cast %57 : vector<1x8x32xf32> to vector<8x32xf32>
      %59 = vector.shape_cast %56 : vector<8x32xf32> to vector<1x8x32xf32>
      tpu.vector_store %arg7[%c0_32, %c0_33, %c0_34], %59 {strides = array<i32>} : memref<1x8x32xf32, #tpu.memory_space<vmem>>, vector<1x8x32xf32>,
    } else {
    }
    return
  }
  func.func @transform_0(%arg0: i32, %arg1: i32, %arg2: i32) -> (i32, i32, i32) {
    %c0_i32 = arith.constant 0 : i32
    %c0_i32_0 = arith.constant 0 : i32
    return %arg0, %arg1, %c0_i32 : i32, i32, i32
  }
  func.func @transform_1(%arg0: i32, %arg1: i32, %arg2: i32) -> (i32, i32, i32) {
    %c0_i32 = arith.constant 0 : i32
    %c0_i32_0 = arith.constant 0 : i32
    return %arg0, %c0_i32, %arg2 : i32, i32, i32
  }
  func.func @transform_2(%arg0: i32, %arg1: i32, %arg2: i32) -> (i32, i32, i32) {
    %c0_i32 = arith.constant 0 : i32
    %c0_i32_0 = arith.constant 0 : i32
    return %arg0, %arg2, %c0_i32 : i32, i32, i32
  }
  func.func @transform_3(%arg0: i32, %arg1: i32, %arg2: i32) -> (i32, i32, i32) {
    %c0_i32 = arith.constant 0 : i32
    return %arg0, %arg1, %arg2 : i32, i32, i32
  }
  func.func @transform_4(%arg0: i32, %arg1: i32, %arg2: i32) -> (i32, i32, i32) {
    %c0_i32 = arith.constant 0 : i32
    %c0_i32_0 = arith.constant 0 : i32
    return %arg0, %arg1, %c0_i32 : i32, i32, i32
  }
}

</mosaic_0001>

<llo_original>
// kernel: tpu_custom_call.1
$region0: #{tpu_custom_call.1}
  #allocation0 [shape = 'u32[]', space=smem, size = 0x4, offset = 0x4, fixed_abs, tag = 'smem constant byte address 0x4 - core index']
  #allocation1 [shape = 'u32[144,128]{1,0:T(1,128)}', space=vmem, size = 0x12000, scoped, tag = 'internal scratch']
  #allocation2 [shape = 'f32[8,1]{1,0:T(8,128)}', space=vmem, size = 0x1000, scoped, tag = 'scratch operand']
  #allocation3 [shape = 'f32[8,33]{1,0:T(8,128)}', space=vmem, size = 0x1000, scoped, tag = 'scratch operand']
  %s0 = inlined_call_operand.vmem [shape: f32[2,8,1], index: 0, kind: input, shape index: {}]
  %s1 = inlined_call_operand.vmem [shape: f32[2,1,8], index: 1, kind: input, shape index: {}]
  %s2 = inlined_call_operand.vmem [shape: bf16[2,8,33], index: 2, kind: input, shape index: {}]
  %s3 = inlined_call_operand.vmem [shape: f32[2,8,8], index: 3, kind: input, shape index: {}]
  %s4 = inlined_call_operand.hbm [shape: f32[2,8,32], index: 4, kind: output, shape index: {}]
  %s5 = sld [smem:[#allocation0]]
  $region57: #{tpu_custom_call.1} parent=0
    _
  %s7 = ssub.s32 1, %s5
  %s8 = scalar_select 0, %s7, %s5
  $region1: #{tpu_custom_call.1} parent=0
    #allocation4 [shape = 'u8[8192]{0}', space=vmem, size = 0x2000, scoped, tag = 'output window, operand 0']
    #allocation5 [shape = 's32[2]{0}', space=sflag, size = 0x8, scoped, tag = 'scoped memory for tpu_custom_call.1']
    %9 = vsyncpa [#allocation5], 0
    %s10 = scalar_lea.sflag [#allocation5], 1
    %11 = vsyncpa %s10, 0
    loop: start=0, step=1, limit=4
    $region2: #{tpu_custom_call.1} parent=1 // loop_pre_header
      _
    $region3: #{tpu_custom_call.1} parent=1 // loop_header
      %s13 = sphi 0, %s17
      %p14 = scmp.ge.s32.totalorder %s13, 4
      %s20 = sphi 0, %s39
      %s21 = sphi 0, %s35
      %s22 = sphi 0, %s31
      %s23 = sphi 0, %s20
      %s24 = sphi 0, %s21
      %s25 = sphi 0, %s22
      %s26 = sphi 0, %s23
      %s27 = sphi 0, %s24
      %s28 = sphi 0, %s25
      %s44 = sphi 0, %s46
      %s47 = sphi 0, %s44
      %s48 = sphi 0, %s47
      %s64 = sphi 0, %s48
      %s72 = sphi 0, %s74
      %s75 = sphi 0, %s72
      %s76 = sphi 0, %s75
      %s92 = sphi 0, %s76
      %s100 = sphi 0, %s102
      %s103 = sphi 0, %s100
      %s104 = sphi 0, %s103
      %s120 = sphi 0, %s104
      %s130 = sphi 0, %s132
      %s133 = sphi 0, %s130
      %s134 = sphi 0, %s133
      %s150 = sphi 0, %s134
      %s158 = sphi 0, %s160
      %s161 = sphi 0, %s158
      %s162 = sphi 0, %s161
      %s178 = sphi 0, %s162
    $region4: #{tpu_custom_call.1} parent=1 // loop_header_branch
      %16 = sbr.rel (%p14) target = $region8
    $region5: #{tpu_custom_call.1} parent=1 // loop_body
      %s18 = ssub.s32 %s13, 1
      %s19 = ssub.s32 %s13, 2
      %s29 = sadd.s32 1, %s22
      %p30 = scmp.ge.s32.totalorder %s29, 1
      %s31 = scalar_select %p30, 0, %s29
      %s32 = sadd.s32 1, %s21
      %s33 = scalar_select %p30, %s32, %s21
      %p34 = scmp.ge.s32.totalorder %s33, 1
      %s35 = scalar_select %p34, 0, %s33
      %s36 = sadd.s32 1, %s20
      %s37 = scalar_select %p34, %s36, %s20
      %p38 = scmp.ge.s32.totalorder %s37, 2
      %s39 = scalar_select %p38, 0, %s37
      %s40 = ssub.s32 %s20, %s39
      %s41 = ssub.s32 %s21, %s35
      %s42 = sor.u32 %s40, %s41
      %p43 = scmp.eq.s32.totalorder %s42, 0
      %s45 = sadd.s32 %s44, 1
      %s46 = scalar_select %p43, %s44, %s45
      %p49 = pneg %p43
      %p50 = scmp.eq.s32.totalorder %s13, 1
      %p51 = por %p49, %p50
      %p52 = scmp.ne.s32.totalorder %s44, %s47
      %p53 = scmp.eq.s32.totalorder %s13, 0
      %p54 = por %p52, %p53
      %p55 = scmp.ne.s32.totalorder %s44, %s47
      %p56 = scmp.eq.s32.totalorder %s18, 1
      %p57 = por %p55, %p56
      %p58 = scmp.ne.s32.totalorder %s47, %s48
      %p59 = scmp.eq.s32.totalorder %s18, 0
      %p60 = por %p58, %p59
      %p61 = scmp.ne.s32.totalorder %s47, %s48
      %p62 = scmp.eq.s32.totalorder %s19, 1
      %p63 = por %p61, %p62
      %p65 = scmp.ne.s32.totalorder %s48, %s64
      %p66 = scmp.eq.s32.totalorder %s19, 0
      %p67 = por %p65, %p66
      %s68 = ssub.s32 %s20, %s39
      %s69 = ssub.s32 %s22, %s31
      %s70 = sor.u32 %s68, %s69
      %p71 = scmp.eq.s32.totalorder %s70, 0
      %s73 = sadd.s32 %s72, 1
      %s74 = scalar_select %p71, %s72, %s73
      %p77 = pneg %p71
      %p78 = scmp.eq.s32.totalorder %s13, 1
      %p79 = por %p77, %p78
      %p80 = scmp.ne.s32.totalorder %s72, %s75
      %p81 = scmp.eq.s32.totalorder %s13, 0
      %p82 = por %p80, %p81
      %p83 = scmp.ne.s32.totalorder %s72, %s75
      %p84 = scmp.eq.s32.totalorder %s18, 1
      %p85 = por %p83, %p84
      %p86 = scmp.ne.s32.totalorder %s75, %s76
      %p87 = scmp.eq.s32.totalorder %s18, 0
      %p88 = por %p86, %p87
      %p89 = scmp.ne.s32.totalorder %s75, %s76
      %p90 = scmp.eq.s32.totalorder %s19, 1
      %p91 = por %p89, %p90
      %p93 = scmp.ne.s32.totalorder %s76, %s92
      %p94 = scmp.eq.s32.totalorder %s19, 0
      %p95 = por %p93, %p94
      %s96 = ssub.s32 %s20, %s39
      %s97 = ssub.s32 %s22, %s31
      %s98 = sor.u32 %s96, %s97
      %p99 = scmp.eq.s32.totalorder %s98, 0
      %s101 = sadd.s32 %s100, 1
      %s102 = scalar_select %p99, %s100, %s101
      %p105 = pneg %p99
      %p106 = scmp.eq.s32.totalorder %s13, 1
      %p107 = por %p105, %p106
      %p108 = scmp.ne.s32.totalorder %s100, %s103
      %p109 = scmp.eq.s32.totalorder %s13, 0
      %p110 = por %p108, %p109
      %p111 = scmp.ne.s32.totalorder %s100, %s103
      %p112 = scmp.eq.s32.totalorder %s18, 1
      %p113 = por %p111, %p112
      %p114 = scmp.ne.s32.totalorder %s103, %s104
      %p115 = scmp.eq.s32.totalorder %s18, 0
      %p116 = por %p114, %p115
      %p117 = scmp.ne.s32.totalorder %s103, %s104
      %p118 = scmp.eq.s32.totalorder %s19, 1
      %p119 = por %p117, %p118
      %p121 = scmp.ne.s32.totalorder %s104, %s120
      %p122 = scmp.eq.s32.totalorder %s19, 0
      %p123 = por %p121, %p122
      %s124 = ssub.s32 %s20, %s39
      %s125 = ssub.s32 %s21, %s35
      %s126 = sor.u32 %s124, %s125
      %s127 = ssub.s32 %s22, %s31
      %s128 = sor.u32 %s126, %s127
      %p129 = scmp.eq.s32.totalorder %s128, 0
      %s131 = sadd.s32 %s130, 1
      %s132 = scalar_select %p129, %s130, %s131
      %p135 = pneg %p129
      %p136 = scmp.eq.s32.totalorder %s13, 1
      %p137 = por %p135, %p136
      %p138 = scmp.ne.s32.totalorder %s130, %s133
      %p139 = scmp.eq.s32.totalorder %s13, 0
      %p140 = por %p138, %p139
      %p141 = scmp.ne.s32.totalorder %s130, %s133
      %p142 = scmp.eq.s32.totalorder %s18, 1
      %p143 = por %p141, %p142
      %p144 = scmp.ne.s32.totalorder %s133, %s134
      %p145 = scmp.eq.s32.totalorder %s18, 0
      %p146 = por %p144, %p145
      %p147 = scmp.ne.s32.totalorder %s133, %s134
      %p148 = scmp.eq.s32.totalorder %s19, 1
      %p149 = por %p147, %p148
      %p151 = scmp.ne.s32.totalorder %s134, %s150
      %p152 = scmp.eq.s32.totalorder %s19, 0
      %p153 = por %p151, %p152
      %s154 = ssub.s32 %s20, %s39
      %s155 = ssub.s32 %s21, %s35
      %s156 = sor.u32 %s154, %s155
      %p157 = scmp.eq.s32.totalorder %s156, 0
      %s159 = sadd.s32 %s158, 1
      %s160 = scalar_select %p157, %s158, %s159
      %p163 = pneg %p157
      %p164 = scmp.eq.s32.totalorder %s13, 1
      %p165 = por %p163, %p164
      %p166 = scmp.ne.s32.totalorder %s158, %s161
      %p167 = scmp.eq.s32.totalorder %s13, 0
      %p168 = por %p166, %p167
      %p169 = scmp.ne.s32.totalorder %s158, %s161
      %p170 = scmp.eq.s32.totalorder %s18, 1
      %p171 = por %p169, %p170
      %p172 = scmp.ne.s32.totalorder %s161, %s162
      %p173 = scmp.eq.s32.totalorder %s18, 0
      %p174 = por %p172, %p173
      %p175 = scmp.ne.s32.totalorder %s161, %s162
      %p176 = scmp.eq.s32.totalorder %s19, 1
      %p177 = por %p175, %p176
      %p179 = scmp.ne.s32.totalorder %s162, %s178
      %p180 = scmp.eq.s32.totalorder %s19, 0
      %p181 = por %p179, %p180
      %p182 = scmp.le.s32.totalorder 1, %s13
      %p183 = scmp.lt.s32.totalorder %s13, 3
      %p184 = pnand %p182, %p183
      %p185 = pneg %p184
      // Predicated region
      $region9: #{tpu_custom_call.1} parent=5 // pred_check
        _
      $region10: #{tpu_custom_call.1} parent=5 // pred_check_branch
        %187 = sbr.rel (%p184) target = $region12
      $region11: #{tpu_custom_call.1} parent=5 // pred_region
        %s188 = ssub.s32 %s13, 1
      $region12: #{tpu_custom_call.1} parent=5 // pred_fallthru
        _
      %p189 = scmp.lt.s32.totalorder %s13, 2
      // Predicated region
      $region13: #{tpu_custom_call.1} parent=5 // pred_check
        %p190 = pneg %p189
      $region14: #{tpu_custom_call.1} parent=5 // pred_check_branch
        %192 = sbr.rel (%p190) target = $region16
      $region15: #{tpu_custom_call.1} parent=5 // pred_region
        // Predicated region
        $region17: #{tpu_custom_call.1} parent=15 // pred_check
          %p193 = pneg %p54
        $region18: #{tpu_custom_call.1} parent=15 // pred_check_branch
          %195 = sbr.rel (%p193) target = $region20
        $region19: #{tpu_custom_call.1} parent=15 // pred_region
          %p196 = scmp.lt.s32.totalorder %s20, 1
          %s197 = scalar_select %p196, %s20, 1
          %p198 = scmp.lt.s32.totalorder %s21, 0
          %s199 = scalar_select %p198, %s21, 0
          %s200 = sadd.s32 %s199, %s197
          %s201 = smul.addr %s200, 8
          %s202 = scalar_lea.vmem %s0, %s201
        $region20: #{tpu_custom_call.1} parent=15 // pred_fallthru
          _
        // Predicated region
        $region21: #{tpu_custom_call.1} parent=15 // pred_check
          %p203 = pneg %p82
        $region22: #{tpu_custom_call.1} parent=15 // pred_check_branch
          %205 = sbr.rel (%p203) target = $region24
        $region23: #{tpu_custom_call.1} parent=15 // pred_region
          %p206 = scmp.lt.s32.totalorder %s20, 1
          %s207 = scalar_select %p206, %s20, 1
          %p208 = scmp.lt.s32.totalorder %s22, 0
          %s209 = scalar_select %p208, %s22, 0
          %s210 = sadd.s32 %s209, %s207
          %s211 = scalar_lea.vmem %s1, %s210
        $region24: #{tpu_custom_call.1} parent=15 // pred_fallthru
          _
        // Predicated region
        $region25: #{tpu_custom_call.1} parent=15 // pred_check
          %p212 = pneg %p110
        $region26: #{tpu_custom_call.1} parent=15 // pred_check_branch
          %214 = sbr.rel (%p212) target = $region28
        $region27: #{tpu_custom_call.1} parent=15 // pred_region
          %p215 = scmp.lt.s32.totalorder %s20, 1
          %s216 = scalar_select %p215, %s20, 1
          %p217 = scmp.lt.s32.totalorder %s22, 0
          %s218 = scalar_select %p217, %s22, 0
          %s219 = sadd.s32 %s218, %s216
          %s220 = smul.addr %s219, 4
          %s221 = scalar_lea.vmem %s2, %s220
        $region28: #{tpu_custom_call.1} parent=15 // pred_fallthru
          _
        // Predicated region
        $region29: #{tpu_custom_call.1} parent=15 // pred_check
          %p222 = pneg %p140
        $region30: #{tpu_custom_call.1} parent=15 // pred_check_branch
          %224 = sbr.rel (%p222) target = $region32
        $region31: #{tpu_custom_call.1} parent=15 // pred_region
          %p225 = scmp.lt.s32.totalorder %s20, 1
          %s226 = scalar_select %p225, %s20, 1
          %p227 = scmp.lt.s32.totalorder %s21, 0
          %s228 = scalar_select %p227, %s21, 0
          %p229 = scmp.lt.s32.totalorder %s22, 0
          %s230 = scalar_select %p229, %s22, 0
          %s231 = sadd.s32 %s230, %s228
          %s232 = sadd.s32 %s231, %s226
          %s233 = smul.addr %s232, 8
          %s234 = scalar_lea.vmem %s3, %s233
        $region32: #{tpu_custom_call.1} parent=15 // pred_fallthru
          _
      $region16: #{tpu_custom_call.1} parent=5 // pred_fallthru
        _
      %p235 = scmp.le.s32.totalorder 1, %s13
      %p236 = scmp.lt.s32.totalorder %s13, 3
      %p237 = pnand %p235, %p236
      %p238 = pneg %p237
      // Predicated region
      $region33: #{tpu_custom_call.1} parent=5 // pred_check
        _
      $region34: #{tpu_custom_call.1} parent=5 // pred_check_branch
        %240 = sbr.rel (%p237) target = $region36
      $region35: #{tpu_custom_call.1} parent=5 // pred_region
        %s241 = ssub.s32 %s13, 1
        %p242 = scmp.lt.s32.totalorder %s23, 1
        %s243 = scalar_select %p242, %s23, 1
        %p244 = scmp.lt.s32.totalorder %s24, 0
        %s245 = scalar_select %p244, %s24, 0
        %s246 = sadd.s32 %s245, %s243
        %s247 = smul.addr %s246, 8
        %s248 = scalar_lea.vmem %s0, %s247
        %p249 = pneg %p60
        %p250 = pneg %p57
        %p251 = scmp.lt.s32.totalorder %s23, 1
        %s252 = scalar_select %p251, %s23, 1
        %p253 = scmp.lt.s32.totalorder %s25, 0
        %s254 = scalar_select %p253, %s25, 0
        %s255 = sadd.s32 %s254, %s252
        %s256 = scalar_lea.vmem %s1, %s255
        %p257 = pneg %p88
        %p258 = pneg %p85
        %p259 = scmp.lt.s32.totalorder %s23, 1
        %s260 = scalar_select %p259, %s23, 1
        %p261 = scmp.lt.s32.totalorder %s25, 0
        %s262 = scalar_select %p261, %s25, 0
        %s263 = sadd.s32 %s262, %s260
        %s264 = smul.addr %s263, 4
        %s265 = scalar_lea.vmem %s2, %s264
        %p266 = pneg %p116
        %p267 = pneg %p113
        %p268 = scmp.lt.s32.totalorder %s23, 1
        %s269 = scalar_select %p268, %s23, 1
        %p270 = scmp.lt.s32.totalorder %s24, 0
        %s271 = scalar_select %p270, %s24, 0
        %p272 = scmp.lt.s32.totalorder %s25, 0
        %s273 = scalar_select %p272, %s25, 0
        %s274 = sadd.s32 %s273, %s271
        %s275 = sadd.s32 %s274, %s269
        %s276 = smul.addr %s275, 8
        %s277 = scalar_lea.vmem %s3, %s276
        %p278 = pneg %p146
        %p279 = pneg %p143
        %p280 = pneg %p174
        %p281 = pneg %p171
        %s282 = sand.u32 %s161, 1
        %s283 = scalar_lea.sflag [#allocation5], %s282
        %s284 = sand.u32 %s161, 1
        %s285 = smul.addr %s284, 8
        %s286 = scalar_lea.vmem [#allocation4], %s285
        %p287 = scmp.lt.s32.totalorder %s23, 1
        %s288 = scalar_select %p287, %s23, 1
        %p289 = scmp.lt.s32.totalorder %s24, 0
        %s290 = scalar_select %p289, %s24, 0
        %s291 = sadd.s32 %s290, %s288
        %s292 = smul.addr %s291, 8
        %s293 = scalar_lea.vmem %s0, %s292
        %p294 = scmp.lt.s32.totalorder %s23, 1
        %s295 = scalar_select %p294, %s23, 1
        %p296 = scmp.lt.s32.totalorder %s25, 0
        %s297 = scalar_select %p296, %s25, 0
        %s298 = sadd.s32 %s297, %s295
        %s299 = scalar_lea.vmem %s1, %s298
        %p300 = scmp.lt.s32.totalorder %s23, 1
        %s301 = scalar_select %p300, %s23, 1
        %p302 = scmp.lt.s32.totalorder %s25, 0
        %s303 = scalar_select %p302, %s25, 0
        %s304 = sadd.s32 %s303, %s301
        %s305 = smul.addr %s304, 4
        %s306 = scalar_lea.vmem %s2, %s305
        %p307 = scmp.lt.s32.totalorder %s23, 1
        %s308 = scalar_select %p307, %s23, 1
        %p309 = scmp.lt.s32.totalorder %s24, 0
        %s310 = scalar_select %p309, %s24, 0
        %p311 = scmp.lt.s32.totalorder %s25, 0
        %s312 = scalar_select %p311, %s25, 0
        %s313 = sadd.s32 %s312, %s310
        %s314 = sadd.s32 %s313, %s308
        %s315 = smul.addr %s314, 8
        %s316 = scalar_lea.vmem %s3, %s315
        %p318 = scmp.eq.s32.totalorder %s25, 0
        // Predicated region
        $region37: #{tpu_custom_call.1} parent=35 // pred_check
          %p319 = pneg %p318
        $region38: #{tpu_custom_call.1} parent=35 // pred_check_branch
          %321 = sbr.rel (%p319) target = $region40
        $region39: #{tpu_custom_call.1} parent=35 // pred_region
          %vm322 = vcmask 7168
          %323 = vst.msk [vmem:[#allocation2] sm:$0xff] %vm322, -inf
          %vm324 = vcmask 269312
          %325 = vst.msk [vmem:[#allocation3] sm:$0xff] %vm324, 0.0
        $region40: #{tpu_custom_call.1} parent=35 // pred_fallthru
          _
        %v326 = vld [vmem:[%s293] sm:$0xff]
        %v327 = vld [vmem:[%s299] sm:$0x1]
        %v328 = vld [vmem:[%s306] sm:$0xf]
        %v329 = vld [vmem:[%s316] sm:$0xff]
        %vm330 = vcmp.gt.f32.partialorder %v329, 0.0
        %332 = vset.pattern.permute.xlu0 0
        %333 = vperm.xlu0 %332, %v326
        %v334 = vpop.permute.xlu0 %333
        %v337 = vlaneseq
        %v338 = vshrl.u32 %v337, 7
        %v339 = vsub.s32 0, %v338
        %v340 = vrot.slane %v327, %v339
        %v342 = vadd.f32 %v334, %v340
        %vm343 = vcmp.gt.f32.partialorder %v342, 0.0
        %v344 = vmul.f32 %v342, 0.2
        %v345 = vsel %vm343, %v342, %v344
        %v346 = vsel %vm330, %v345, -9e+15
        %v347 = vld [vmem:[#allocation2] sm:$0xff]
        %vm348 = vcmask 64512
        %v349 = vsel %vm348, %v346, -inf
        %350 = vmax.xlane.f32.xlu0 %v349
        %v351 = vpop.xlane.xlu0 %350
        %v352 = vmax.f32 %v347, %v351
        %v353 = vsub.f32 %v347, %v352
        %v354 = vmul.f32 %v353, 1.442695
        %v355 = vpow.pop %v354
        %357 = vset.pattern.permute.xlu0 0
        %358 = vperm.xlu0 %357, %v352
        %v359 = vpop.permute.xlu0 %358
        %v361 = vsub.f32 %v346, %v359
        %v362 = vmul.f32 %v361, 1.442695
        %v363 = vpow.pop %v362
        %v364 = vpack.c.bf16 %v363, %v363
        %v366 = vsel %vm348, %v364, 0
        %vm368 = vcmask 1043456
        %v370 = vsel %vm368, %v328, 0
        %372 = vmatprep.subr.bf16.mxu0 0
        %373 = vmatpush1.bf16.msra.mxu0 %v370
        %374 = vmatprep.subr.bf16.mxu0 0
        %375 = vmatpush1.bf16.msra.mxu0 0
        %376 = vmatprep.subr.bf16.mxu0 0
        %377 = vmatpush1.bf16.msra.mxu0 0
        %378 = vmatprep.subr.bf16.mxu0 0
        %379 = vmatpush1.bf16.msra.mxu0 0
        %380 = vmatprep.subr.bf16.mxu0 0
        %381 = vmatpush1.bf16.msra.mxu0 0
        %382 = vmatprep.subr.bf16.mxu0 0
        %383 = vmatpush1.bf16.msra.mxu0 0
        %384 = vmatprep.subr.bf16.mxu0 0
        %385 = vmatpush1.bf16.msra.mxu0 0
        %386 = vmatprep.subr.bf16.mxu0 0
        %387 = vmatpush1.bf16.msra.mxu0 0
        %388 = vmatprep.subr.bf16.mxu0 0
        %389 = vmatpush1.bf16.msra.mxu0 0
        %390 = vmatprep.subr.bf16.mxu0 0
        %391 = vmatpush1.bf16.msra.mxu0 0
        %392 = vmatprep.subr.bf16.mxu0 0
        %393 = vmatpush1.bf16.msra.mxu0 0
        %394 = vmatprep.subr.bf16.mxu0 0
        %395 = vmatpush1.bf16.msra.mxu0 0
        %396 = vmatprep.subr.bf16.mxu0 0
        %397 = vmatpush1.bf16.msra.mxu0 0
        %398 = vmatprep.subr.bf16.mxu0 0
        %399 = vmatpush1.bf16.msra.mxu0 0
        %400 = vmatprep.subr.bf16.mxu0 0
        %401 = vmatpush1.bf16.msra.mxu0 0
        %402 = vmatprep.subr.bf16.mxu0 0
        %403 = vmatpush1.bf16.msra.mxu0 0
        %404 = vmatprep.mubr.bf16.mxu0 0
        %405 = vmatmul.mubr.bf16.gmra.mrb[0].mxu0 %v366
        %v406 = vpop.f32.mrb[0].mxu0
        %v407 = vadd.f32 0.0, %v406
        %v408 = vpop.f32.mrb[0].mxu0
        %v409 = vpop.f32.mrb[0].mxu0
        %v410 = vpop.f32.mrb[0].mxu0
        %411 = vdwg.mxu0
        %v412 = vld [vmem:[#allocation3] sm:$0xff]
        %414 = vset.pattern.permute.xlu0 0
        %415 = vperm.xlu0 %414, %v355
        %v416 = vpop.permute.xlu0 %415
        %v418 = vmul.f32 %v416, %v412
        %v419 = vadd.f32 %v418, %v407
        %vm420 = vcmask 269312
        %421 = vst.msk [vmem:[#allocation3] sm:$0xff] %vm420, %v419
        %vm422 = vcmask 7168
        %423 = vst.msk [vmem:[#allocation2] sm:$0xff] %vm422, %v352
        // Predicated region
        $region41: #{tpu_custom_call.1} parent=35 // pred_check
          %p424 = pneg %p318
        $region42: #{tpu_custom_call.1} parent=35 // pred_check_branch
          %426 = sbr.rel (%p424) target = $region44
        $region43: #{tpu_custom_call.1} parent=35 // pred_region
          %v427 = vld [vmem:[#allocation3] sm:$0xff]
          %v428 = vrcp.pop %v427
          %430 = vset.pattern.permute.xlu0 32
          %431 = vperm.xlu0 %430, %v428
          %v432 = vpop.permute.xlu0 %431
          %v434 = vmul.f32 %v427, %v432
          %vm435 = vcmp.gt.f32.partialorder %v434, 0.0
          %v436 = vmin.f32 %v434, 0.0
          %v437 = vmul.f32 %v436, 1.442695
          %v438 = vpow.pop %v437
          %v439 = vsub.f32 %v438, 1.0
          %v440 = vsel %vm435, %v434, %v439
          %vm441 = vcmask 261120
          %442 = vst.msk [vmem:[%s286] sm:$0xff] %vm441, %v440
        $region44: #{tpu_custom_call.1} parent=35 // pred_fallthru
          _
        %s443 = sand.u32 %s161, 1
        %s444 = scalar_lea.sflag [#allocation5], %s443
        %s445 = sand.u32 %s161, 1
        %s446 = smul.addr %s445, 8
        %s447 = scalar_lea.vmem [#allocation4], %s446
        // Predicated region
        $region45: #{tpu_custom_call.1} parent=35 // pred_check
          %p448 = pneg %p171
        $region46: #{tpu_custom_call.1} parent=35 // pred_check_branch
          %450 = sbr.rel (%p448) target = $region48
        $region47: #{tpu_custom_call.1} parent=35 // pred_region
          %s452 = ssub.s32 128, 128
          %453 = vsyncadd %s444, %s452
          %s454 = sadd.s32 %s24, %s23
          %s455 = smul.addr %s454, 128
          %s456 = scalar_lea.hbm %s4, %s455
          %s458 = sshll.u32 %s447, 4
          %s459 = int_to_ptr.vmem [resolvable:$true] %s458
          %461 = dma.vmem_to_hbm [thread:$0]  %s459, 128, %s456, %s444
        $region48: #{tpu_custom_call.1} parent=35 // pred_fallthru
          _
      $region36: #{tpu_custom_call.1} parent=5 // pred_fallthru
        _
      %p462 = scmp.le.s32.totalorder 2, %s13
      // Predicated region
      $region49: #{tpu_custom_call.1} parent=5 // pred_check
        %p463 = pneg %p462
      $region50: #{tpu_custom_call.1} parent=5 // pred_check_branch
        %465 = sbr.rel (%p463) target = $region52
      $region51: #{tpu_custom_call.1} parent=5 // pred_region
        %s466 = ssub.s32 %s13, 2
        // Predicated region
        $region53: #{tpu_custom_call.1} parent=51 // pred_check
          %p467 = pneg %p177
        $region54: #{tpu_custom_call.1} parent=51 // pred_check_branch
          %469 = sbr.rel (%p467) target = $region56
        $region55: #{tpu_custom_call.1} parent=51 // pred_region
          %s470 = sand.u32 %s162, 1
          %s471 = scalar_lea.sflag [#allocation5], %s470
          %s472 = sand.u32 %s162, 1
          %s473 = smul.addr %s472, 8
          %s474 = scalar_lea.vmem [#allocation4], %s473
          %475 = dma.done %s471, 128
        $region56: #{tpu_custom_call.1} parent=51 // pred_fallthru
          _
      $region52: #{tpu_custom_call.1} parent=5 // pred_fallthru
        _
    $region6: #{tpu_custom_call.1} parent=1 // loop_footer
      %s17 = sadd.s32 1, %s13
    $region7: #{tpu_custom_call.1} parent=1 // loop_footer_branch
      %12 = sbr.rel target = $region3
    $region8: #{tpu_custom_call.1} parent=1 // loop_exit
      _
    %476 = vsyncpa [#allocation5], 1
    %s477 = scalar_lea.sflag [#allocation5], 1
    %478 = vsyncpa %s477, 1

</llo_original>
